<compile_context>
chip_gen: v5e
topology: v5e:2x2
jax: 0.10.0
libtpu: 0.0.40
codegen_flags: <defaults>
</compile_context>

<pallas_src>
import jax
import jax.numpy as jnp
from jax.experimental import pallas as pl
from jax.experimental.pallas import tpu as pltpu


def _round_up(n, m):
    return ((n + m - 1) // m) * m


def _dqn_q_kernel(x_ref, w1_ref, b1_ref, w2_ref, b2_ref, o_ref):
    # x_ref: (TB, K)   w1_ref: (K, H)   b1_ref: (1, H)
    # w2_ref: (H, Ap)  b2_ref: (1, Ap)  o_ref: (TB, Ap)   -- f32, VMEM.
    x = x_ref[...]
    h = jnp.dot(x, w1_ref[...], preferred_element_type=jnp.float32)
    h = jnp.maximum(h + b1_ref[...], 0.0)                       # ReLU 1
    q = jnp.dot(h, w2_ref[...], preferred_element_type=jnp.float32)
    # Final ReLU kept: the PyTorch module applies F.relu on the Q head.
    o_ref[...] = jnp.maximum(q + b2_ref[...], 0.0)              # ReLU 2


def _make_dqn_act_kernel(num_actions):
    def kernel(x_ref, w1_ref, b1_ref, w2_ref, b2_ref, o_ref):
        x = x_ref[...]
        h = jnp.dot(x, w1_ref[...], preferred_element_type=jnp.float32)
        h = jnp.maximum(h + b1_ref[...], 0.0)
        q = jnp.dot(h, w2_ref[...], preferred_element_type=jnp.float32)
        q = jnp.maximum(q + b2_ref[...], 0.0)
        # Argmax restricted to the real action lanes (padded lanes are exactly
        # 0 after the head ReLU and must not win ties).  First-max index,
        # matching torch/jnp argmax tie-break.
        lane = jax.lax.broadcasted_iota(jnp.int32, q.shape, 1)
        valid = lane < num_actions
        q_m = jnp.where(valid, q, -1.0)                  # q >= 0 after ReLU
        row_max = jnp.max(q_m, axis=-1, keepdims=True)
        cand = jnp.where(jnp.logical_and(valid, q_m == row_max),
                         lane, jnp.int32(q.shape[-1]))
        o_ref[...] = jnp.min(cand, axis=-1, keepdims=True).astype(jnp.int32)
    return kernel


def _tile_rows(batch, block_b):
    # Large tiles amortise the ~0.35 us per-grid-step cost; cap to half the
    # batch (rounded to the 8-row sublane) so the grid has >= 2 steps when
    # there is enough work, letting the "parallel" axis use both v7x cores.
    return max(8, min(block_b, _round_up(pl.cdiv(batch, 2), 8)))


def _dqn_pallas(kernel, x, w1, b1, w2p, b2p, out_shape, out_block, tb):
    batch, k = x.shape
    h = w1.shape[1]
    ap = w2p.shape[1]
    grid = (pl.cdiv(batch, tb),)           # ragged last block handled by Pallas
    return pl.pallas_call(
        kernel,
        out_shape=out_shape,
        grid=grid,
        in_specs=[
            pl.BlockSpec((tb, k), lambda i: (i, 0)),   # x: tiled over batch
            pl.BlockSpec((k, h), lambda i: (0, 0)),    # w1: VMEM-resident
            pl.BlockSpec((1, h), lambda i: (0, 0)),    # b1: VMEM-resident
            pl.BlockSpec((h, ap), lambda i: (0, 0)),   # w2: VMEM-resident
            pl.BlockSpec((1, ap), lambda i: (0, 0)),   # b2: VMEM-resident
        ],
        out_specs=pl.BlockSpec(out_block, lambda i: (i, 0)),
        compiler_params=pltpu.CompilerParams(
            dimension_semantics=("parallel",)),
    )(x, w1, b1, w2p, b2p)


def _prep(x, w1, b1, w2, b2):
    x = jnp.asarray(x, jnp.float32)
    w1 = jnp.asarray(w1, jnp.float32)
    h = w1.shape[1]
    a = w2.shape[1]
    ap = _round_up(a, 128)
    b1 = jnp.asarray(b1, jnp.float32).reshape(1, h)
    # Lane-pad the head once (parameter-sized, negligible vs. activations);
    # padded action lanes contribute exactly 0 and are 0 after the head ReLU.
    w2p = jnp.pad(jnp.asarray(w2, jnp.float32), ((0, 0), (0, ap - a)))
    b2p = jnp.pad(jnp.asarray(b2, jnp.float32).reshape(1, a),
                  ((0, 0), (0, ap - a)))
    return x, w1, b1, w2p, b2p, a, ap


def dqn_forward_padded(x, w1, b1, w2, b2, *, block_b=2048):
    """Q-values lane-padded to (B, round_up(A,128)); fastest Q path — slice
    [:, :A] in the consumer, ideally under the same jit."""
    x, w1, b1, w2p, b2p, _, ap = _prep(x, w1, b1, w2, b2)
    batch = x.shape[0]
    tb = _tile_rows(batch, block_b)
    return _dqn_pallas(_dqn_q_kernel, x, w1, b1, w2p, b2p,
                       jax.ShapeDtypeStruct((batch, ap), jnp.float32),
                       (tb, ap), tb)


def dqn_forward(x, w1, b1, w2, b2, *, block_b=2048):
    """Exact module semantics: (B, in_channels) f32 -> (B, action_space) f32.

    Weights stored pre-transposed vs. PyTorch: w1 (in, 256), w2 (256, A);
    biases as (1, out) rows.
    """
    a = w2.shape[1]
    return dqn_forward_padded(x, w1, b1, w2, b2, block_b=block_b)[:, :a]


def dqn_act(x, w1, b1, w2, b2, *, block_b=2048):
    """Greedy action ids (B,) int32, argmax fused into the kernel
    (writeback drops to 4 B/row)."""
    x, w1, b1, w2p, b2p, a, _ = _prep(x, w1, b1, w2, b2)
    batch = x.shape[0]
    tb = _tile_rows(batch, block_b)
    out = _dqn_pallas(_make_dqn_act_kernel(a), x, w1, b1, w2p, b2p,
                      jax.ShapeDtypeStruct((batch, 1), jnp.int32),
                      (tb, 1), tb)
    return out.reshape(batch)


def init_params(key, in_channels=5, hidden=256, action_space=7):
    """Synthetic params matching nn.Linear shapes (stored transposed)."""
    k1, k2, k3, k4 = jax.random.split(key, 4)
    bound1 = 1.0 / (in_channels ** 0.5)
    bound2 = 1.0 / (hidden ** 0.5)
    w1 = jax.random.uniform(k1, (in_channels, hidden), jnp.float32,
                            -bound1, bound1)
    b1 = jax.random.uniform(k2, (1, hidden), jnp.float32, -bound1, bound1)
    w2 = jax.random.uniform(k3, (hidden, action_space), jnp.float32,
                            -bound2, bound2)
    b2 = jax.random.uniform(k4, (1, action_space), jnp.float32,
                            -bound2, bound2)
    return w1, b1, w2, b2


if __name__ == "__main__":
    key = jax.random.PRNGKey(0)
    kx, kp = jax.random.split(key)

    batch = 8
    in_channels = 5        # DQNAgent default in_channels=5
    hidden = 256
    action_space = 7       # SIMPLE_MOVEMENT has 7 actions

    x = jax.random.normal(kx, (batch, in_channels), jnp.float32)
    w1, b1, w2, b2 = init_params(kp, in_channels, hidden, action_space)

    fwd = jax.jit(dqn_forward)      # slice lives under the same jit
    act_fn = jax.jit(dqn_act)

    out = jax.block_until_ready(fwd(x, w1, b1, w2, b2))
    ref = jnp.maximum(jnp.maximum(x @ w1 + b1, 0.0) @ w2 + b2, 0.0)
    assert out.shape == (batch, action_space)
    assert jnp.allclose(out, ref, atol=1e-5, rtol=1e-5)

    acts = jax.block_until_ready(act_fn(x, w1, b1, w2, b2))
    assert acts.shape == (batch,)
    assert jnp.array_equal(acts, jnp.argmax(out, axis=-1).astype(jnp.int32))

    # Larger, non-multiple batch: exercises the ragged last block (no wrapper
    # batch padding) and the >=2-step grid split.
    x_big = jax.random.normal(kx, (1000, in_channels), jnp.float32)
    out_big = jax.block_until_ready(fwd(x_big, w1, b1, w2, b2))
    ref_big = jnp.maximum(jnp.maximum(x_big @ w1 + b1, 0.0) @ w2 + b2, 0.0)
    assert out_big.shape == (1000, action_space)
    assert jnp.allclose(out_big, ref_big, atol=1e-5, rtol=1e-5)

    acts_big = jax.block_until_ready(act_fn(x_big, w1, b1, w2, b2))
    assert jnp.array_equal(acts_big,
                           jnp.argmax(out_big, axis=-1).astype(jnp.int32))

    # TODO(synk): save()/load() checkpoint I/O and the training/replay-buffer
    # loop are host-side PyTorch plumbing, not part of the forward pass.
    print("KERNEL_OK")
</pallas_src>

<mosaic_0001>
module attributes {stable_mosaic.version = 11 : i64} {
  func.func @_dqn_q_kernel(%arg0: i32, %arg1: memref<8x5xf32, #tpu.memory_space<vmem>>, %arg2: memref<5x256xf32, #tpu.memory_space<vmem>>, %arg3: memref<1x256xf32, #tpu.memory_space<vmem>>, %arg4: memref<256x128xf32, #tpu.memory_space<vmem>>, %arg5: memref<1x128xf32, #tpu.memory_space<vmem>>, %arg6: memref<8x128xf32, #tpu.memory_space<vmem>>) attributes {dimension_semantics = [#tpu.dimension_semantics<parallel>], iteration_bounds = array<i64: 1>, scalar_prefetch = 0 : i64, scratch_operands = 0 : i64, tpu.core_type = #tpu.core_type<tc>, window_params = [{transform_indices = @transform_0, window_bounds = array<i64: 8, 5>}, {pipeline_mode = #tpu.pipeline_mode<synchronous>, transform_indices = @transform_1, window_bounds = array<i64: 5, 256>}, {pipeline_mode = #tpu.pipeline_mode<synchronous>, transform_indices = @transform_2, window_bounds = array<i64: 1, 256>}, {pipeline_mode = #tpu.pipeline_mode<synchronous>, transform_indices = @transform_3, window_bounds = array<i64: 256, 128>}, {pipeline_mode = #tpu.pipeline_mode<synchronous>, transform_indices = @transform_4, window_bounds = array<i64: 1, 128>}, {transform_indices = @transform_5, window_bounds = array<i64: 8, 128>}]} {
    %c0 = arith.constant 0 : index
    %c0_0 = arith.constant 0 : index
    %0 = vector.load %arg1[%c0, %c0_0] : memref<8x5xf32, #tpu.memory_space<vmem>>, vector<8x5xf32>
    %c0_1 = arith.constant 0 : index
    %c0_2 = arith.constant 0 : index
    %1 = vector.load %arg2[%c0_1, %c0_2] : memref<5x256xf32, #tpu.memory_space<vmem>>, vector<5x256xf32>
    %cst = arith.constant dense<0.000000e+00> : vector<8x256xf32>
    %2 = tpu.matmul %0, %1, %cst {dimension_numbers = #tpu.dot_dimension_numbers<[1], [0], [0], [1], [0, 0, 1, 1], [], []>} : vector<8x5xf32>, vector<5x256xf32>, vector<8x256xf32> -> vector<8x256xf32>
    %c0_3 = arith.constant 0 : index
    %c0_4 = arith.constant 0 : index
    %3 = vector.load %arg3[%c0_3, %c0_4] : memref<1x256xf32, #tpu.memory_space<vmem>>, vector<1x256xf32>
    %4 = vector.broadcast %3 : vector<1x256xf32> to vector<8x256xf32>
    %5 = arith.addf %2, %4 : vector<8x256xf32>
    %cst_5 = arith.constant 0.000000e+00 : f32
    %6 = vector.broadcast %cst_5 : f32 to vector<8x256xf32>
    %7 = arith.maximumf %5, %6 : vector<8x256xf32>
    %c0_6 = arith.constant 0 : index
    %c0_7 = arith.constant 0 : index
    %8 = vector.load %arg4[%c0_6, %c0_7] : memref<256x128xf32, #tpu.memory_space<vmem>>, vector<256x128xf32>
    %cst_8 = arith.constant dense<0.000000e+00> : vector<8x128xf32>
    %9 = tpu.matmul %7, %8, %cst_8 {dimension_numbers = #tpu.dot_dimension_numbers<[1], [0], [0], [1], [0, 0, 1, 1], [], []>} : vector<8x256xf32>, vector<256x128xf32>, vector<8x128xf32> -> vector<8x128xf32>
    %c0_9 = arith.constant 0 : index
    %c0_10 = arith.constant 0 : index
    %10 = vector.load %arg5[%c0_9, %c0_10] : memref<1x128xf32, #tpu.memory_space<vmem>>, vector<1x128xf32>
    %11 = vector.broadcast %10 : vector<1x128xf32> to vector<8x128xf32>
    %12 = arith.addf %9, %11 : vector<8x128xf32>
    %cst_11 = arith.constant 0.000000e+00 : f32
    %13 = vector.broadcast %cst_11 : f32 to vector<8x128xf32>
    %14 = arith.maximumf %12, %13 : vector<8x128xf32>
    %c0_12 = arith.constant 0 : index
    %c0_13 = arith.constant 0 : index
    %15 = vector.load %arg6[%c0_12, %c0_13] : memref<8x128xf32, #tpu.memory_space<vmem>>, vector<8x128xf32>
    tpu.vector_store %arg6[%c0_12, %c0_13], %14 {strides = array<i32>} : memref<8x128xf32, #tpu.memory_space<vmem>>, vector<8x128xf32>,
    return
  }
  func.func @transform_0(%arg0: i32) -> (i32, i32) {
    %c0_i32 = arith.constant 0 : i32
    %c0_i32_0 = arith.constant 0 : i32
    return %arg0, %c0_i32 : i32, i32
  }
  func.func @transform_1(%arg0: i32) -> (i32, i32) {
    %c0_i32 = arith.constant 0 : i32
    %c0_i32_0 = arith.constant 0 : i32
    %c0_i32_1 = arith.constant 0 : i32
    return %c0_i32, %c0_i32_0 : i32, i32
  }
  func.func @transform_2(%arg0: i32) -> (i32, i32) {
    %c0_i32 = arith.constant 0 : i32
    %c0_i32_0 = arith.constant 0 : i32
    %c0_i32_1 = arith.constant 0 : i32
    return %c0_i32, %c0_i32_0 : i32, i32
  }
  func.func @transform_3(%arg0: i32) -> (i32, i32) {
    %c0_i32 = arith.constant 0 : i32
    %c0_i32_0 = arith.constant 0 : i32
    %c0_i32_1 = arith.constant 0 : i32
    return %c0_i32, %c0_i32_0 : i32, i32
  }
  func.func @transform_4(%arg0: i32) -> (i32, i32) {
    %c0_i32 = arith.constant 0 : i32
    %c0_i32_0 = arith.constant 0 : i32
    %c0_i32_1 = arith.constant 0 : i32
    return %c0_i32, %c0_i32_0 : i32, i32
  }
  func.func @transform_5(%arg0: i32) -> (i32, i32) {
    %c0_i32 = arith.constant 0 : i32
    %c0_i32_0 = arith.constant 0 : i32
    return %arg0, %c0_i32 : i32, i32
  }
}

</mosaic_0001>

<llo_original>
// kernel: dqn_forward.1
$region0: #{dqn_forward.1}
  #allocation0 [shape = 'u32[]', space=smem, size = 0x4, offset = 0x4, fixed_abs, tag = 'smem constant byte address 0x4 - core index']
  #allocation1 [shape = 'u32[72,128]{1,0:T(1,128)}', space=vmem, size = 0x9000, scoped, tag = 'internal scratch']
  %s0 = inlined_call_operand.vmem [shape: f32[8,5], index: 0, kind: input, shape index: {}]
  %s1 = inlined_call_operand.vmem [shape: f32[5,256], index: 1, kind: input, shape index: {}]
  %s2 = inlined_call_operand.vmem [shape: f32[1,256], index: 2, kind: input, shape index: {}]
  %s3 = inlined_call_operand.vmem [shape: f32[256,128], index: 3, kind: input, shape index: {}]
  %s4 = inlined_call_operand.vmem [shape: f32[1,128], index: 4, kind: input, shape index: {}]
  %s5 = inlined_call_operand.hbm [shape: f32[8,128], index: 5, kind: output, shape index: {}]
  %s6 = sld [smem:[#allocation0]]
  $region30: #{dqn_forward.1} parent=0
    _
  %s8 = ssub.s32 1, %s6
  %s9 = scalar_select 0, %s8, %s6
  $region1: #{dqn_forward.1} parent=0
    #allocation2 [shape = 'u8[4096]{0}', space=vmem, size = 0x1000, scoped, tag = 'output window, operand 0, single buffered']
    #allocation3 [shape = 's32[1]{0}', space=sflag, size = 0x4, scoped, tag = 'scoped memory for dqn_forward.1']
    %10 = vsyncpa [#allocation3], 0
    // Predicated region
    $region2: #{dqn_forward.1} parent=1 // pred_check
      _
    $region3: #{dqn_forward.1} parent=1 // pred_check_branch
      %12 = sbr.rel (0) target = $region5
    $region4: #{dqn_forward.1} parent=1 // pred_region
      _
    $region5: #{dqn_forward.1} parent=1 // pred_fallthru
      _
    // Predicated region
    $region6: #{dqn_forward.1} parent=1 // pred_check
      _
    $region7: #{dqn_forward.1} parent=1 // pred_check_branch
      %14 = sbr.rel (0) target = $region9
    $region8: #{dqn_forward.1} parent=1 // pred_region
      _
    $region9: #{dqn_forward.1} parent=1 // pred_fallthru
      _
    // Predicated region
    $region10: #{dqn_forward.1} parent=1 // pred_check
      _
    $region11: #{dqn_forward.1} parent=1 // pred_check_branch
      %16 = sbr.rel (0) target = $region13
    $region12: #{dqn_forward.1} parent=1 // pred_region
      _
    $region13: #{dqn_forward.1} parent=1 // pred_fallthru
      _
    // Predicated region
    $region14: #{dqn_forward.1} parent=1 // pred_check
      _
    $region15: #{dqn_forward.1} parent=1 // pred_check_branch
      %18 = sbr.rel (0) target = $region17
    $region16: #{dqn_forward.1} parent=1 // pred_region
      _
    $region17: #{dqn_forward.1} parent=1 // pred_fallthru
      _
    // Predicated region
    $region18: #{dqn_forward.1} parent=1 // pred_check
      _
    $region19: #{dqn_forward.1} parent=1 // pred_check_branch
      %20 = sbr.rel (0) target = $region21
    $region20: #{dqn_forward.1} parent=1 // pred_region
      _
    $region21: #{dqn_forward.1} parent=1 // pred_fallthru
      _
    %v21 = vld [vmem:[%s0] sm:$0xff]
    %v22 = vld [vmem:[%s1] sm:$0x1f]
    %v23 = vld [vmem:[%s1 + $0x8] sm:$0x1f]
    %v24 = vld [vmem:[%s2] sm:$0x3]
    %v26 = vperm.slane %v24, 0
    %v27 = vperm.slane %v24, 1
    %vm30 = vcmask 39936
    %v32 = vsel %vm30, %v21, 0
    %vm34 = vcmask 1044480
    %v36 = vsel %vm34, %v22, 0
    %v39 = vsel %vm34, %v23, 0
    %41 = vmatpush.msra.mxu0 0.0
    %42 = vmatpush.msra.mxu0 0.0
    %43 = vmatpush.msra.mxu0 0.0
    %44 = vmatpush.msra.mxu0 0.0
    %45 = vmatpush.msra.mxu0 0.0
    %46 = vmatpush.msra.mxu0 0.0
    %47 = vmatpush.msra.mxu0 0.0
    %48 = vmatpush.msra.mxu0 0.0
    %49 = vmatpush.msra.mxu0 0.0
    %50 = vmatpush.msra.mxu0 0.0
    %51 = vmatpush.msra.mxu0 0.0
    %52 = vmatpush.msra.mxu0 0.0
    %53 = vmatpush.msra.mxu0 0.0
    %54 = vmatpush.msra.mxu0 0.0
    %55 = vmatpush.msra.mxu0 0.0
    %56 = vmatpush.msra.mxu0 %v36
    %57 = vmatmul.f32.gmra.mxu0 %v32
    %v58 = vpop.f32.mrf.mxu0
    %v59 = vadd.f32 %v26, %v58
    %60 = vdwg.mxu0
    %61 = vmatpush.msra.mxu0 0.0
    %62 = vmatpush.msra.mxu0 0.0
    %63 = vmatpush.msra.mxu0 0.0
    %64 = vmatpush.msra.mxu0 0.0
    %65 = vmatpush.msra.mxu0 0.0
    %66 = vmatpush.msra.mxu0 0.0
    %67 = vmatpush.msra.mxu0 0.0
    %68 = vmatpush.msra.mxu0 0.0
    %69 = vmatpush.msra.mxu0 0.0
    %70 = vmatpush.msra.mxu0 0.0
    %71 = vmatpush.msra.mxu0 0.0
    %72 = vmatpush.msra.mxu0 0.0
    %73 = vmatpush.msra.mxu0 0.0
    %74 = vmatpush.msra.mxu0 0.0
    %75 = vmatpush.msra.mxu0 0.0
    %76 = vmatpush.msra.mxu0 %v39
    %77 = vmatmul.f32.gmra.mxu0 %v32
    %v78 = vpop.f32.mrf.mxu0
    %v79 = vadd.f32 %v27, %v78
    %80 = vdwg.mxu0
    %v81 = vmax.f32 %v59, 0.0
    %v82 = vmax.f32 %v79, 0.0
    %v83 = vld [vmem:[%s3] sm:$0xff]
    %v84 = vld [vmem:[%s3 + $0x8] sm:$0xff]
    %v85 = vld [vmem:[%s3 + $0x10] sm:$0xff]
    %v86 = vld [vmem:[%s3 + $0x18] sm:$0xff]
    %v87 = vld [vmem:[%s3 + $0x20] sm:$0xff]
    %v88 = vld [vmem:[%s3 + $0x28] sm:$0xff]
    %v89 = vld [vmem:[%s3 + $0x30] sm:$0xff]
    %v90 = vld [vmem:[%s3 + $0x38] sm:$0xff]
    %v91 = vld [vmem:[%s3 + $0x40] sm:$0xff]
    %v92 = vld [vmem:[%s3 + $0x48] sm:$0xff]
    %v93 = vld [vmem:[%s3 + $0x50] sm:$0xff]
    %v94 = vld [vmem:[%s3 + $0x58] sm:$0xff]
    %v95 = vld [vmem:[%s3 + $0x60] sm:$0xff]
    %v96 = vld [vmem:[%s3 + $0x68] sm:$0xff]
    %v97 = vld [vmem:[%s3 + $0x70] sm:$0xff]
    %v98 = vld [vmem:[%s3 + $0x78] sm:$0xff]
    %v99 = vld [vmem:[%s3 + $0x80] sm:$0xff]
    %v100 = vld [vmem:[%s3 + $0x88] sm:$0xff]
    %v101 = vld [vmem:[%s3 + $0x90] sm:$0xff]
    %v102 = vld [vmem:[%s3 + $0x98] sm:$0xff]
    %v103 = vld [vmem:[%s3 + $0xa0] sm:$0xff]
    %v104 = vld [vmem:[%s3 + $0xa8] sm:$0xff]
    %v105 = vld [vmem:[%s3 + $0xb0] sm:$0xff]
    %v106 = vld [vmem:[%s3 + $0xb8] sm:$0xff]
    %v107 = vld [vmem:[%s3 + $0xc0] sm:$0xff]
    %v108 = vld [vmem:[%s3 + $0xc8] sm:$0xff]
    %v109 = vld [vmem:[%s3 + $0xd0] sm:$0xff]
    %v110 = vld [vmem:[%s3 + $0xd8] sm:$0xff]
    %v111 = vld [vmem:[%s3 + $0xe0] sm:$0xff]
    %v112 = vld [vmem:[%s3 + $0xe8] sm:$0xff]
    %v113 = vld [vmem:[%s3 + $0xf0] sm:$0xff]
    %v114 = vld [vmem:[%s3 + $0xf8] sm:$0xff]
    %v115 = vld [vmem:[%s4] sm:$0x1]
    %v117 = vperm.slane %v115, 0
    %119 = vmatpush.msra.mxu0 %v98
    %120 = vmatpush.msra.mxu0 %v97
    %121 = vmatpush.msra.mxu0 %v96
    %122 = vmatpush.msra.mxu0 %v95
    %123 = vmatpush.msra.mxu0 %v94
    %124 = vmatpush.msra.mxu0 %v93
    %125 = vmatpush.msra.mxu0 %v92
    %126 = vmatpush.msra.mxu0 %v91
    %127 = vmatpush.msra.mxu0 %v90
    %128 = vmatpush.msra.mxu0 %v89
    %129 = vmatpush.msra.mxu0 %v88
    %130 = vmatpush.msra.mxu0 %v87
    %131 = vmatpush.msra.mxu0 %v86
    %132 = vmatpush.msra.mxu0 %v85
    %133 = vmatpush.msra.mxu0 %v84
    %134 = vmatpush.msra.mxu0 %v83
    %135 = vmatmul.f32.gmra.mxu0 %v81
    %v136 = vpop.f32.mrf.mxu0
    %v137 = vadd.f32 %v117, %v136
    %138 = vdwg.mxu0
    %139 = vmatpush.msra.mxu0 %v114
    %140 = vmatpush.msra.mxu0 %v113
    %141 = vmatpush.msra.mxu0 %v112
    %142 = vmatpush.msra.mxu0 %v111
    %143 = vmatpush.msra.mxu0 %v110
    %144 = vmatpush.msra.mxu0 %v109
    %145 = vmatpush.msra.mxu0 %v108
    %146 = vmatpush.msra.mxu0 %v107
    %147 = vmatpush.msra.mxu0 %v106
    %148 = vmatpush.msra.mxu0 %v105
    %149 = vmatpush.msra.mxu0 %v104
    %150 = vmatpush.msra.mxu0 %v103
    %151 = vmatpush.msra.mxu0 %v102
    %152 = vmatpush.msra.mxu0 %v101
    %153 = vmatpush.msra.mxu0 %v100
    %154 = vmatpush.msra.mxu0 %v99
    %155 = vmatmul.f32.gmra.mxu0 %v82
    %v156 = vpop.f32.mrf.mxu0
    %v157 = vadd.f32 %v137, %v156
    %158 = vdwg.mxu0
    %v159 = vmax.f32 %v157, 0.0
    %160 = vst [vmem:[#allocation2] sm:$0xff] %v159
    // Predicated region
    $region22: #{dqn_forward.1} parent=1 // pred_check
      _
    $region23: #{dqn_forward.1} parent=1 // pred_check_branch
      %162 = sbr.rel (0) target = $region25
    $region24: #{dqn_forward.1} parent=1 // pred_region
      %164 = vsyncadd [#allocation3], 0
      %s166 = sshll.u32 [#allocation2], 4
      %s167 = int_to_ptr.vmem [resolvable:$true] %s166
      %s168 = sshll.u32 %s5, 4
      %s169 = int_to_ptr.hbm [resolvable:$true] %s168
      %171 = dma.vmem_to_hbm [thread:$0]  %s167, 128, %s169, [#allocation3]
    $region25: #{dqn_forward.1} parent=1 // pred_fallthru
      _
    // Predicated region
    $region26: #{dqn_forward.1} parent=1 // pred_check
      _
    $region27: #{dqn_forward.1} parent=1 // pred_check_branch
      %173 = sbr.rel (0) target = $region29
    $region28: #{dqn_forward.1} parent=1 // pred_region
      %175 = dma.done [#allocation3], 128
    $region29: #{dqn_forward.1} parent=1 // pred_fallthru
      _
    %176 = vsyncpa [#allocation3], 1

</llo_original>
